<compile_context>
chip_gen: v5e
topology: v5e:2x2
jax: 0.10.0
libtpu: 0.0.40
codegen_flags: <defaults>
</compile_context>

<pallas_src>
import functools
import math

import jax
import jax.numpy as jnp
from jax.experimental import pallas as pl
from jax.experimental.pallas import tpu as pltpu


_VMEM_LIMIT_BYTES = 64 * 1024 * 1024  # <= physical VMEM on v5e/v6e (128 MiB) and v7x (64 MiB/TC)


# --------------------------------------------------------------------------------------
# Tile selection helpers (every block dim is (8,128)-aligned or the full extent).
# --------------------------------------------------------------------------------------
def _pick_tile(dim, target, align):
    """Largest t <= target with t % align == 0 and dim % t == 0.

    Falls back to the full dim (always a legal Mosaic block shape) when no aligned
    divisor exists, so blocks are either (8,128)-aligned or full-extent.
    """
    if dim <= target:
        return dim
    t = (target // align) * align
    while t >= align:
        if dim % t == 0:
            return t
        t -= align
    return dim


def _default_seq_tile():
    # v6e/v7x: 256 tiles better fill the 2x256x256 MXU and halve per-step pipeline
    # overhead; keep 128 on v5e (4x128x128 MXU) and older parts.
    try:
        kind = jax.devices()[0].device_kind.lower()
    except Exception:
        return 128
    return 256 if ("v6" in kind or "v7" in kind) else 128


def _pick_head_block(num_heads, d_head, seq_tile, *, budget_bytes=24 * 1024 * 1024):
    """Heads per attention block.

    Largest head chunk whose per-step tiles fit a conservative VMEM budget (keeps v7x's
    64 MiB VMEM safe at 256-wide tiles); the chunk lane width hb*d_head must be a
    multiple of 128 (lane-dense loads/stores) unless all heads are taken (full-extent
    block, always legal).
    """
    candidates = [h for h in range(1, num_heads + 1) if num_heads % h == 0]
    allowed = [h for h in candidates if h == num_heads or (h * d_head) % 128 == 0]
    best = min(allowed)
    for hb in sorted(allowed, reverse=True):
        width = hb * d_head
        # q/k/v/out blocks (bf16, double-buffered) + f32 accumulator scratch.
        est = 4 * 2 * seq_tile * width * 2 + seq_tile * width * 4
        if est <= budget_bytes:
            return hb
    return best


# --------------------------------------------------------------------------------------
# K-tiled accumulator matmul:  y = x2d @ w_t   (w_t is (in, out), pre-transposed).
# --------------------------------------------------------------------------------------
def _matmul_kernel(x_ref, w_ref, o_ref, acc_ref):
    @pl.when(pl.program_id(2) == 0)
    def _init():
        acc_ref[...] = jnp.zeros(acc_ref.shape, acc_ref.dtype)

    acc_ref[...] += jnp.dot(x_ref[...], w_ref[...],
                            preferred_element_type=jnp.float32)

    @pl.when(pl.program_id(2) == pl.num_programs(2) - 1)
    def _store():
        o_ref[...] = acc_ref[...].astype(o_ref.dtype)


def _pallas_linear(x2d, w_t, out_dtype, *, row_tile=512, col_tile=512, k_tile=512):
    R, K = x2d.shape
    K2, N = w_t.shape
    assert K == K2
    tr = _pick_tile(R, row_tile, 8)
    tn = _pick_tile(N, col_tile, 128)
    tk = _pick_tile(K, k_tile, 128)
    return pl.pallas_call(
        _matmul_kernel,
        out_shape=jax.ShapeDtypeStruct((R, N), out_dtype),
        grid=(R // tr, N // tn, K // tk),
        in_specs=[
            pl.BlockSpec((tr, tk), lambda i, j, k: (i, k)),
            pl.BlockSpec((tk, tn), lambda i, j, k: (k, j)),
        ],
        out_specs=pl.BlockSpec((tr, tn), lambda i, j, k: (i, j)),
        scratch_shapes=[pltpu.VMEM((tr, tn), jnp.float32)],
        compiler_params=pltpu.CompilerParams(
            dimension_semantics=("parallel", "parallel", "arbitrary"),
            vmem_limit_bytes=_VMEM_LIMIT_BYTES),
    )(x2d, w_t)


# --------------------------------------------------------------------------------------
# Fused QKV projection producing three separate lane-dense planes: (3, B*L, D).
# w3 is (3, D, D) = stack(Wq^T * sm_scale, Wk^T, Wv^T) in bf16.
# --------------------------------------------------------------------------------------
def _qkv_kernel(x_ref, w_ref, o_ref, acc_ref):
    @pl.when(pl.program_id(3) == 0)
    def _init():
        acc_ref[...] = jnp.zeros(acc_ref.shape, acc_ref.dtype)

    acc_ref[...] += jnp.dot(x_ref[...], w_ref[0],
                            preferred_element_type=jnp.float32)

    @pl.when(pl.program_id(3) == pl.num_programs(3) - 1)
    def _store():
        o_ref[0] = acc_ref[...].astype(o_ref.dtype)


def _qkv_projection(x2d, w3, out_dtype, *, row_tile=512, col_tile=512, k_tile=512):
    R, K = x2d.shape
    three, K2, N = w3.shape
    assert three == 3 and K == K2
    tr = _pick_tile(R, row_tile, 8)
    tn = _pick_tile(N, col_tile, 128)
    tk = _pick_tile(K, k_tile, 128)
    return pl.pallas_call(
        _qkv_kernel,
        out_shape=jax.ShapeDtypeStruct((3, R, N), out_dtype),
        grid=(R // tr, 3, N // tn, K // tk),
        in_specs=[
            pl.BlockSpec((tr, tk), lambda i, s, j, k: (i, k)),
            pl.BlockSpec((1, tk, tn), lambda i, s, j, k: (s, k, j)),
        ],
        out_specs=pl.BlockSpec((1, tr, tn), lambda i, s, j, k: (s, i, j)),
        scratch_shapes=[pltpu.VMEM((tr, tn), jnp.float32)],
        compiler_params=pltpu.CompilerParams(
            dimension_semantics=("parallel", "parallel", "parallel", "arbitrary"),
            vmem_limit_bytes=_VMEM_LIMIT_BYTES),
    )(x2d, w3)


# --------------------------------------------------------------------------------------
# Flash attention (causal), online softmax, head-chunked blocks.
# qkv: (3, B, L, D) bf16 (q already pre-scaled by 1/sqrt(d_head) via the weights).
# Output: (B, L, D) bf16, written as lane-dense (tq, hb*dh) blocks.
# --------------------------------------------------------------------------------------
def _flash_attn_kernel(q_ref, k_ref, v_ref, o_ref, m_sc, l_sc, acc_sc,
                       *, heads_per_block, d_head, tq, tk):
    # NOTE: relies on ki being the innermost, sequentially iterated ("arbitrary") axis,
    # and on tq == tk (diagonal tile is exactly ki == qi and is the last processed one).
    qi = pl.program_id(2)
    ki = pl.program_id(3)

    @pl.when(ki == 0)
    def _init():
        m_sc[...] = jnp.full(m_sc.shape, -jnp.inf, dtype=m_sc.dtype)
        l_sc[...] = jnp.zeros(l_sc.shape, l_sc.dtype)
        acc_sc[...] = jnp.zeros(acc_sc.shape, acc_sc.dtype)

    def _process(on_diagonal):
        q = q_ref[0, 0]                                    # (tq, hb*dh) bf16 (pre-scaled)
        k = k_ref[0, 0]                                    # (tk, hb*dh) bf16
        v = v_ref[0, 0]                                    # (tk, hb*dh) bf16

        if on_diagonal:
            # Global q/k offsets coincide on the diagonal (tq == tk), so the mask is
            # purely tile-local; strictly-past tiles skip the bias entirely.
            rows = jax.lax.broadcasted_iota(jnp.int32, (tq, tk), 0)
            cols = jax.lax.broadcasted_iota(jnp.int32, (tq, tk), 1)
            bias = jnp.where(rows >= cols, 0.0, -1e30).astype(jnp.float32)

        for h in range(heads_per_block):
            sl = slice(h * d_head, (h + 1) * d_head)
            q_h = q[:, sl]
            k_h = k[:, sl]
            v_h = v[:, sl]
            # q @ k^T without an explicit transpose (natively supported contraction).
            s = jax.lax.dot_general(q_h, k_h, (((1,), (1,)), ((), ())),
                                    preferred_element_type=jnp.float32)  # (tq, tk) f32
            if on_diagonal:
                s = s + bias

            # TODO(synk): on v6e/v7x the exp below could run in bf16 for ~2x EUP relief;
            # kept in f32 here for accuracy portability (v5e EUP has no bf16).
            m_prev = m_sc[h]                                # (tq, 1) f32
            m_new = jnp.maximum(m_prev, jnp.max(s, axis=-1, keepdims=True))
            alpha = jnp.exp(m_prev - m_new)
            p = jnp.exp(s - m_new)                          # (tq, tk) f32
            l_sc[h] = alpha * l_sc[h] + jnp.sum(p, axis=-1, keepdims=True)
            acc_sc[:, sl] = alpha * acc_sc[:, sl] + jnp.dot(
                p.astype(v_h.dtype), v_h, preferred_element_type=jnp.float32)
            m_sc[h] = m_new

        if on_diagonal:
            # The diagonal tile is the last processed k-tile for this q-tile: finalize
            # and emit one lane-dense (tq, hb*dh) store.
            parts = []
            for h in range(heads_per_block):
                sl = slice(h * d_head, (h + 1) * d_head)
                inv_l = pl.reciprocal(l_sc[h], approx=True)  # EUP slot, ~free
                parts.append(acc_sc[:, sl] * inv_l)
            o_ref[0] = jnp.concatenate(parts, axis=-1).astype(o_ref.dtype)

    @pl.when(ki < qi)       # strictly in the past: fully unmasked tile
    def _past():
        _process(False)

    @pl.when(ki == qi)      # diagonal-crossing tile: masked + finalize
    def _diag():
        _process(True)
    # ki > qi: fully in the future -> no compute, and the clamped index maps below also
    # avoid fetching those K/V blocks from HBM.


def _flash_attention(qkv, num_heads, *, seq_tile=None):
    three, B, L, D = qkv.shape
    assert three == 3 and D % num_heads == 0
    d_head = D // num_heads

    tq = _pick_tile(L, seq_tile if seq_tile is not None else _default_seq_tile(), 8)
    tk = tq
    nq, nk = L // tq, L // tk

    hb = _pick_head_block(num_heads, d_head, tq)
    ng = num_heads // hb
    width = hb * d_head

    kernel = functools.partial(_flash_attn_kernel, heads_per_block=hb,
                               d_head=d_head, tq=tq, tk=tk)

    clamp = jnp.minimum  # causal frontier: repeat the block index -> Pallas elides the DMA
    return pl.pallas_call(
        kernel,
        out_shape=jax.ShapeDtypeStruct((B, L, D), qkv.dtype),
        grid=(B, ng, nq, nk),
        in_specs=[
            pl.BlockSpec((1, 1, tq, width), lambda b, g, qi, ki: (0, b, qi, g)),
            pl.BlockSpec((1, 1, tk, width), lambda b, g, qi, ki: (1, b, clamp(ki, qi), g)),
            pl.BlockSpec((1, 1, tk, width), lambda b, g, qi, ki: (2, b, clamp(ki, qi), g)),
        ],
        out_specs=pl.BlockSpec((1, tq, width), lambda b, g, qi, ki: (b, qi, g)),
        scratch_shapes=[
            pltpu.VMEM((hb, tq, 1), jnp.float32),   # running max m, per head
            pltpu.VMEM((hb, tq, 1), jnp.float32),   # running sum l, per head
            pltpu.VMEM((tq, width), jnp.float32),   # lane-dense output accumulator
        ],
        compiler_params=pltpu.CompilerParams(
            dimension_semantics=("parallel", "parallel", "parallel", "arbitrary"),
            vmem_limit_bytes=_VMEM_LIMIT_BYTES),
    )(qkv, qkv, qkv)


# --------------------------------------------------------------------------------------
# Full MultiHeadAttention forward.
# --------------------------------------------------------------------------------------
def multi_head_attention(x, wq, wk, wv, wo, num_heads, compute_dtype=jnp.bfloat16):
    B, L, D = x.shape
    d_head = D // num_heads
    sm_scale = 1.0 / math.sqrt(d_head)

    # One-time weight prep (tiny, wrapper-side): pre-transposed (in, out) weights stacked
    # as (3, D, D); the 1/sqrt(d_head) softmax scale is folded into Wq so the attention
    # kernel never rescales scores.
    w3 = jnp.stack([wq.T * sm_scale, wk.T, wv.T], axis=0).astype(compute_dtype)
    wo_t = wo.T.astype(compute_dtype)
    x2d = x.reshape(B * L, D).astype(compute_dtype)

    qkv = _qkv_projection(x2d, w3, compute_dtype)          # (3, B*L, D) bf16
    qkv = qkv.reshape(3, B, L, D)                          # free metadata reshape

    # TODO(synk): apply_rope in the reference is an identity stub, so RoPE is not applied here either.

    ctx = _flash_attention(qkv, num_heads)                 # (B, L, D) bf16, lane-dense
    out = _pallas_linear(ctx.reshape(B * L, D), wo_t, x.dtype)
    return out.reshape(B, L, D)


# --------------------------------------------------------------------------------------
# Init + references for verification.
# --------------------------------------------------------------------------------------
def _init_linear_weight(key, out_features, in_features, dtype=jnp.float32):
    # Mirrors Linear.__init__: trunc_normal_(0, std, -3std, 3std), std = 2/(in+out).
    std = 2.0 / (in_features + out_features)
    w = jax.random.truncated_normal(
        key, lower=-3.0, upper=3.0, shape=(out_features, in_features),
        dtype=jnp.float32) * std
    return w.astype(dtype)


def _reference_mha_f32(x, wq, wk, wv, wo, num_heads):
    B, L, D = x.shape
    dh = D // num_heads
    q = (x @ wq.T).reshape(B, L, num_heads, dh).transpose(0, 2, 1, 3)
    k = (x @ wk.T).reshape(B, L, num_heads, dh).transpose(0, 2, 1, 3)
    v = (x @ wv.T).reshape(B, L, num_heads, dh).transpose(0, 2, 1, 3)
    s = jnp.einsum("bhqd,bhkd->bhqk", q, k) / math.sqrt(dh)
    mask = jnp.tril(jnp.ones((L, L), dtype=bool))[None, None]
    s = jnp.where(mask, s, -jnp.inf)
    p = jax.nn.softmax(s, axis=-1)
    out = jnp.einsum("bhqk,bhkd->bhqd", p, v).transpose(0, 2, 1, 3).reshape(B, L, D)
    return out @ wo.T


def _reference_mha_matched(x, wq, wk, wv, wo, num_heads, compute_dtype=jnp.bfloat16):
    # Same math as the kernels with matching bf16/f32 precision choices (incl. the
    # sm_scale folded into Wq before the bf16 cast).
    B, L, D = x.shape
    dh = D // num_heads
    cd = compute_dtype
    scale = 1.0 / math.sqrt(dh)
    xc = x.reshape(B * L, D).astype(cd)

    def proj(w_t):
        y = jnp.dot(xc, w_t.astype(cd), preferred_element_type=jnp.float32)
        return y.astype(cd).reshape(B, L, num_heads, dh).transpose(0, 2, 1, 3)

    q = proj(wq.T * scale)
    k = proj(wk.T)
    v = proj(wv.T)
    s = jnp.einsum("bhqd,bhkd->bhqk", q, k, preferred_element_type=jnp.float32)
    mask = jnp.tril(jnp.ones((L, L), dtype=bool))[None, None]
    s = jnp.where(mask, s, -1e30)
    m = jnp.max(s, axis=-1, keepdims=True)
    p = jnp.exp(s - m)
    l = jnp.sum(p, axis=-1, keepdims=True)
    ctx = jnp.einsum("bhqk,bhkd->bhqd", p.astype(cd), v,
                     preferred_element_type=jnp.float32) / l
    ctx = ctx.astype(cd).transpose(0, 2, 1, 3).reshape(B * L, D)
    out = jnp.dot(ctx, wo.T.astype(cd), preferred_element_type=jnp.float32)
    return out.reshape(B, L, D).astype(x.dtype)


if __name__ == "__main__":
    B, L, D, H = 2, 8, 32, 4  # batch, seq, d_model, num_heads

    key = jax.random.PRNGKey(0)
    kx, kq, kk, kv, ko = jax.random.split(key, 5)

    x = jax.random.normal(kx, (B, L, D), dtype=jnp.float32)
    wq = _init_linear_weight(kq, D, D)
    wk = _init_linear_weight(kk, D, D)
    wv = _init_linear_weight(kv, D, D)
    wo = _init_linear_weight(ko, D, D)

    out = jax.block_until_ready(multi_head_attention(x, wq, wk, wv, wo, num_heads=H))

    assert out.shape == (B, L, D)
    ref_bf16 = _reference_mha_matched(x, wq, wk, wv, wo, H)
    ref_f32 = _reference_mha_f32(x, wq, wk, wv, wo, H)
    assert jnp.allclose(out, ref_bf16, atol=2e-3, rtol=5e-2), "mismatch vs bf16-matched ref"
    assert jnp.allclose(out, ref_f32, atol=2e-2, rtol=2e-1), "mismatch vs f32 reference"

    print("KERNEL_OK")
</pallas_src>

<mosaic_0001>
module attributes {stable_mosaic.version = 11 : i64} {
  func.func @_qkv_kernel(%arg0: i32, %arg1: i32, %arg2: i32, %arg3: i32, %arg4: memref<16x32xbf16, #tpu.memory_space<vmem>>, %arg5: memref<1x32x32xbf16, #tpu.memory_space<vmem>>, %arg6: memref<1x16x32xbf16, #tpu.memory_space<vmem>>, %arg7: memref<16x32xf32, #tpu.memory_space<vmem>>) attributes {dimension_semantics = [#tpu.dimension_semantics<parallel>, #tpu.dimension_semantics<parallel>, #tpu.dimension_semantics<parallel>, #tpu.dimension_semantics<arbitrary>], iteration_bounds = array<i64: 1, 3, 1, 1>, scalar_prefetch = 0 : i64, scratch_operands = 1 : i64, tpu.core_type = #tpu.core_type<tc>, window_params = [{transform_indices = @transform_0, window_bounds = array<i64: 16, 32>}, {transform_indices = @transform_1, window_bounds = array<i64: 1, 32, 32>}, {transform_indices = @transform_2, window_bounds = array<i64: 1, 16, 32>}]} {
    %c0_i32 = arith.constant 0 : i32
    %0 = arith.cmpi eq, %arg3, %c0_i32 : i32
    %1 = arith.extui %0 : i1 to i32
    %c0_i32_0 = arith.constant 0 : i32
    %2 = arith.cmpi ne, %1, %c0_i32_0 : i32
    scf.if %2 {
      %cst_11 = arith.constant 0.000000e+00 : f32
      %13 = vector.broadcast %cst_11 : f32 to vector<16x32xf32>
      %c0_12 = arith.constant 0 : index
      %c0_13 = arith.constant 0 : index
      %14 = vector.load %arg7[%c0_12, %c0_13] : memref<16x32xf32, #tpu.memory_space<vmem>>, vector<16x32xf32>
      tpu.vector_store %arg7[%c0_12, %c0_13], %13 {strides = array<i32>} : memref<16x32xf32, #tpu.memory_space<vmem>>, vector<16x32xf32>,
    } else {
    }
    %c0 = arith.constant 0 : index
    %c0_1 = arith.constant 0 : index
    %3 = vector.load %arg7[%c0, %c0_1] : memref<16x32xf32, #tpu.memory_space<vmem>>, vector<16x32xf32>
    %c0_2 = arith.constant 0 : index
    %c0_3 = arith.constant 0 : index
    %4 = vector.load %arg4[%c0_2, %c0_3] : memref<16x32xbf16, #tpu.memory_space<vmem>>, vector<16x32xbf16>
    %c0_4 = arith.constant 0 : index
    %c0_5 = arith.constant 0 : index
    %c0_6 = arith.constant 0 : index
    %5 = vector.load %arg5[%c0_4, %c0_5, %c0_6] : memref<1x32x32xbf16, #tpu.memory_space<vmem>>, vector<1x32x32xbf16>
    %6 = vector.shape_cast %5 : vector<1x32x32xbf16> to vector<32x32xbf16>
    %cst = arith.constant dense<0.000000e+00> : vector<16x32xf32>
    %7 = tpu.matmul %4, %6, %cst {dimension_numbers = #tpu.dot_dimension_numbers<[1], [0], [0], [1], [0, 0, 1, 1], [], []>} : vector<16x32xbf16>, vector<32x32xbf16>, vector<16x32xf32> -> vector<16x32xf32>
    %8 = arith.addf %3, %7 : vector<16x32xf32>
    %c0_7 = arith.constant 0 : index
    %c0_8 = arith.constant 0 : index
    %9 = vector.load %arg7[%c0_7, %c0_8] : memref<16x32xf32, #tpu.memory_space<vmem>>, vector<16x32xf32>
    tpu.vector_store %arg7[%c0_7, %c0_8], %8 {strides = array<i32>} : memref<16x32xf32, #tpu.memory_space<vmem>>, vector<16x32xf32>,
    %c0_i32_9 = arith.constant 0 : i32
    %10 = arith.cmpi eq, %arg3, %c0_i32_9 : i32
    %11 = arith.extui %10 : i1 to i32
    %c0_i32_10 = arith.constant 0 : i32
    %12 = arith.cmpi ne, %11, %c0_i32_10 : i32
    scf.if %12 {
      %c0_11 = arith.constant 0 : index
      %c0_12 = arith.constant 0 : index
      %13 = vector.load %arg7[%c0_11, %c0_12] : memref<16x32xf32, #tpu.memory_space<vmem>>, vector<16x32xf32>
      %14 = arith.truncf %13 : vector<16x32xf32> to vector<16x32xbf16>
      %c0_13 = arith.constant 0 : index
      %c0_14 = arith.constant 0 : index
      %c0_15 = arith.constant 0 : index
      %15 = vector.load %arg6[%c0_13, %c0_14, %c0_15] : memref<1x16x32xbf16, #tpu.memory_space<vmem>>, vector<1x16x32xbf16>
      %16 = vector.shape_cast %15 : vector<1x16x32xbf16> to vector<16x32xbf16>
      %17 = vector.shape_cast %14 : vector<16x32xbf16> to vector<1x16x32xbf16>
      tpu.vector_store %arg6[%c0_13, %c0_14, %c0_15], %17 {strides = array<i32>} : memref<1x16x32xbf16, #tpu.memory_space<vmem>>, vector<1x16x32xbf16>,
    } else {
    }
    return
  }
  func.func @transform_0(%arg0: i32, %arg1: i32, %arg2: i32, %arg3: i32) -> (i32, i32) {
    %c0_i32 = arith.constant 0 : i32
    return %arg0, %arg3 : i32, i32
  }
  func.func @transform_1(%arg0: i32, %arg1: i32, %arg2: i32, %arg3: i32) -> (i32, i32, i32) {
    %c0_i32 = arith.constant 0 : i32
    return %arg1, %arg3, %arg2 : i32, i32, i32
  }
  func.func @transform_2(%arg0: i32, %arg1: i32, %arg2: i32, %arg3: i32) -> (i32, i32, i32) {
    %c0_i32 = arith.constant 0 : i32
    return %arg1, %arg0, %arg2 : i32, i32, i32
  }
}

</mosaic_0001>

<llo_original>
// kernel: tpu_custom_call.1
$region0: #{tpu_custom_call.1}
  #allocation0 [shape = 'u32[]', space=smem, size = 0x4, offset = 0x4, fixed_abs, tag = 'smem constant byte address 0x4 - core index']
  #allocation1 [shape = 'u32[72,128]{1,0:T(1,128)}', space=vmem, size = 0x9000, scoped, tag = 'internal scratch']
  #allocation2 [shape = 'f32[16,32]{1,0:T(8,128)}', space=vmem, size = 0x2000, scoped, tag = 'scratch operand']
  %s0 = inlined_call_operand.hbm [shape: bf16[16,32], index: 0, kind: input, shape index: {}]
  %s1 = inlined_call_operand.hbm [shape: bf16[3,32,32], index: 1, kind: input, shape index: {}]
  %s2 = inlined_call_operand.hbm [shape: bf16[3,16,32], index: 2, kind: output, shape index: {}]
  %s3 = sld [smem:[#allocation0]]
  $region57: #{tpu_custom_call.1} parent=0
    _
  %s5 = ssub.s32 1, %s3
  %s6 = scalar_select 0, %s5, %s3
  $region1: #{tpu_custom_call.1} parent=0
    #allocation3 [shape = 'u8[4096]{0}', space=vmem, size = 0x1000, scoped, tag = 'input window, operand 0, single buffered']
    #allocation4 [shape = 's32[2]{0}', space=sflag, size = 0x8, scoped, tag = 'scoped memory for tpu_custom_call.1']
    #allocation5 [shape = 's32[2]{0}', space=sflag, size = 0x8, scoped, tag = 'scoped memory for tpu_custom_call.1']
    #allocation6 [shape = 'u8[16384]{0}', space=vmem, size = 0x4000, scoped, tag = 'input window, operand 1']
    #allocation7 [shape = 's32[2]{0}', space=sflag, size = 0x8, scoped, tag = 'scoped memory for tpu_custom_call.1']
    #allocation8 [shape = 'u8[8192]{0}', space=vmem, size = 0x2000, scoped, tag = 'output window, operand 0']
    %7 = vsyncpa [#allocation4], 0
    %8 = vsyncpa [#allocation7], 0
    %s9 = scalar_lea.sflag [#allocation7], 1
    %10 = vsyncpa %s9, 0
    %11 = vsyncpa [#allocation5], 0
    %s12 = scalar_lea.sflag [#allocation5], 1
    %13 = vsyncpa %s12, 0
    loop: start=0, step=1, limit=5
    $region2: #{tpu_custom_call.1} parent=1 // loop_pre_header
      _
    $region3: #{tpu_custom_call.1} parent=1 // loop_header
      %s15 = sphi 0, %s19
      %p16 = scmp.ge.s32.totalorder %s15, 5
      %s22 = sphi 0, %s48
      %s23 = sphi 0, %s44
      %s24 = sphi 0, %s40
      %s25 = sphi 0, %s36
      %s26 = sphi 0, %s22
      %s27 = sphi 0, %s23
      %s28 = sphi 0, %s24
      %s29 = sphi 0, %s25
      %s30 = sphi 0, %s26
      %s31 = sphi 0, %s27
      %s32 = sphi 0, %s28
      %s33 = sphi 0, %s29
      %s53 = sphi 0, %s55
      %s56 = sphi 0, %s53
      %s57 = sphi 0, %s56
      %s73 = sphi 0, %s57
      %s83 = sphi 0, %s85
      %s86 = sphi 0, %s83
      %s87 = sphi 0, %s86
      %s103 = sphi 0, %s87
      %s113 = sphi 0, %s115
      %s116 = sphi 0, %s113
      %s117 = sphi 0, %s116
      %s133 = sphi 0, %s117
    $region4: #{tpu_custom_call.1} parent=1 // loop_header_branch
      %18 = sbr.rel (%p16) target = $region8
    $region5: #{tpu_custom_call.1} parent=1 // loop_body
      %s20 = ssub.s32 %s15, 1
      %s21 = ssub.s32 %s15, 2
      %s34 = sadd.s32 1, %s25
      %p35 = scmp.ge.s32.totalorder %s34, 1
      %s36 = scalar_select %p35, 0, %s34
      %s37 = sadd.s32 1, %s24
      %s38 = scalar_select %p35, %s37, %s24
      %p39 = scmp.ge.s32.totalorder %s38, 1
      %s40 = scalar_select %p39, 0, %s38
      %s41 = sadd.s32 1, %s23
      %s42 = scalar_select %p39, %s41, %s23
      %p43 = scmp.ge.s32.totalorder %s42, 3
      %s44 = scalar_select %p43, 0, %s42
      %s45 = sadd.s32 1, %s22
      %s46 = scalar_select %p43, %s45, %s22
      %p47 = scmp.ge.s32.totalorder %s46, 1
      %s48 = scalar_select %p47, 0, %s46
      %s49 = ssub.s32 %s22, %s48
      %s50 = ssub.s32 %s25, %s36
      %s51 = sor.u32 %s49, %s50
      %p52 = scmp.eq.s32.totalorder %s51, 0
      %s54 = sadd.s32 %s53, 1
      %s55 = scalar_select %p52, %s53, %s54
      %p58 = pneg %p52
      %p59 = scmp.eq.s32.totalorder %s15, 2
      %p60 = por %p58, %p59
      %p61 = scmp.ne.s32.totalorder %s53, %s56
      %p62 = scmp.eq.s32.totalorder %s15, 0
      %p63 = por %p61, %p62
      %p64 = scmp.ne.s32.totalorder %s53, %s56
      %p65 = scmp.eq.s32.totalorder %s20, 2
      %p66 = por %p64, %p65
      %p67 = scmp.ne.s32.totalorder %s56, %s57
      %p68 = scmp.eq.s32.totalorder %s20, 0
      %p69 = por %p67, %p68
      %p70 = scmp.ne.s32.totalorder %s56, %s57
      %p71 = scmp.eq.s32.totalorder %s21, 2
      %p72 = por %p70, %p71
      %p74 = scmp.ne.s32.totalorder %s57, %s73
      %p75 = scmp.eq.s32.totalorder %s21, 0
      %p76 = por %p74, %p75
      %s77 = ssub.s32 %s23, %s44
      %s78 = ssub.s32 %s25, %s36
      %s79 = sor.u32 %s77, %s78
      %s80 = ssub.s32 %s24, %s40
      %s81 = sor.u32 %s79, %s80
      %p82 = scmp.eq.s32.totalorder %s81, 0
      %s84 = sadd.s32 %s83, 1
      %s85 = scalar_select %p82, %s83, %s84
      %p88 = pneg %p82
      %p89 = scmp.eq.s32.totalorder %s15, 2
      %p90 = por %p88, %p89
      %p91 = scmp.ne.s32.totalorder %s83, %s86
      %p92 = scmp.eq.s32.totalorder %s15, 0
      %p93 = por %p91, %p92
      %p94 = scmp.ne.s32.totalorder %s83, %s86
      %p95 = scmp.eq.s32.totalorder %s20, 2
      %p96 = por %p94, %p95
      %p97 = scmp.ne.s32.totalorder %s86, %s87
      %p98 = scmp.eq.s32.totalorder %s20, 0
      %p99 = por %p97, %p98
      %p100 = scmp.ne.s32.totalorder %s86, %s87
      %p101 = scmp.eq.s32.totalorder %s21, 2
      %p102 = por %p100, %p101
      %p104 = scmp.ne.s32.totalorder %s87, %s103
      %p105 = scmp.eq.s32.totalorder %s21, 0
      %p106 = por %p104, %p105
      %s107 = ssub.s32 %s23, %s44
      %s108 = ssub.s32 %s22, %s48
      %s109 = sor.u32 %s107, %s108
      %s110 = ssub.s32 %s24, %s40
      %s111 = sor.u32 %s109, %s110
      %p112 = scmp.eq.s32.totalorder %s111, 0
      %s114 = sadd.s32 %s113, 1
      %s115 = scalar_select %p112, %s113, %s114
      %p118 = pneg %p112
      %p119 = scmp.eq.s32.totalorder %s15, 2
      %p120 = por %p118, %p119
      %p121 = scmp.ne.s32.totalorder %s113, %s116
      %p122 = scmp.eq.s32.totalorder %s15, 0
      %p123 = por %p121, %p122
      %p124 = scmp.ne.s32.totalorder %s113, %s116
      %p125 = scmp.eq.s32.totalorder %s20, 2
      %p126 = por %p124, %p125
      %p127 = scmp.ne.s32.totalorder %s116, %s117
      %p128 = scmp.eq.s32.totalorder %s20, 0
      %p129 = por %p127, %p128
      %p130 = scmp.ne.s32.totalorder %s116, %s117
      %p131 = scmp.eq.s32.totalorder %s21, 2
      %p132 = por %p130, %p131
      %p134 = scmp.ne.s32.totalorder %s117, %s133
      %p135 = scmp.eq.s32.totalorder %s21, 0
      %p136 = por %p134, %p135
      %p137 = scmp.le.s32.totalorder 1, %s15
      %p138 = scmp.lt.s32.totalorder %s15, 4
      %p139 = pnand %p137, %p138
      %p140 = pneg %p139
      // Predicated region
      $region9: #{tpu_custom_call.1} parent=5 // pred_check
        _
      $region10: #{tpu_custom_call.1} parent=5 // pred_check_branch
        %142 = sbr.rel (%p139) target = $region12
      $region11: #{tpu_custom_call.1} parent=5 // pred_region
        %s143 = ssub.s32 %s15, 1
        // Predicated region
        $region13: #{tpu_custom_call.1} parent=11 // pred_check
          %p144 = pneg %p69
        $region14: #{tpu_custom_call.1} parent=11 // pred_check_branch
          %146 = sbr.rel (%p144) target = $region16
        $region15: #{tpu_custom_call.1} parent=11 // pred_region
          %s147 = smul.u32 2, %s26
          %149 = vsyncadd [#allocation4], 0
          %s150 = sadd.s32 %s29, %s147
          %s151 = smul.addr %s150, 4
          %s152 = scalar_lea.hbm %s0, %s151
          %s153 = sshll.u32 %s152, 4
          %s154 = int_to_ptr.hbm [resolvable:$true] %s153
          %s155 = sshll.u32 [#allocation3], 4
          %s156 = int_to_ptr.vmem [resolvable:$true] %s155
          %161 = dma.hbm_to_vmem [thread:$0]  %s154, 128, %s156, [#allocation4], 64, 64, 4
        $region16: #{tpu_custom_call.1} parent=11 // pred_fallthru
          _
      $region12: #{tpu_custom_call.1} parent=5 // pred_fallthru
        _
      %p162 = scmp.lt.s32.totalorder %s15, 3
      // Predicated region
      $region17: #{tpu_custom_call.1} parent=5 // pred_check
        %p163 = pneg %p162
      $region18: #{tpu_custom_call.1} parent=5 // pred_check_branch
        %165 = sbr.rel (%p163) target = $region20
      $region19: #{tpu_custom_call.1} parent=5 // pred_region
        // Predicated region
        $region21: #{tpu_custom_call.1} parent=19 // pred_check
          %p166 = pneg %p93
        $region22: #{tpu_custom_call.1} parent=19 // pred_check_branch
          %168 = sbr.rel (%p166) target = $region24
        $region23: #{tpu_custom_call.1} parent=19 // pred_region
          %s169 = sand.u32 %s83, 1
          %s170 = scalar_lea.sflag [#allocation7], %s169
          %s171 = sand.u32 %s83, 1
          %s172 = smul.addr %s171, 16
          %s173 = scalar_lea.vmem [#allocation6], %s172
          %s174 = smul.u32 4, %s25
          %176 = vsyncadd %s170, 0
          %s177 = sadd.s32 %s24, %s174
          %s178 = smul.addr %s23, 4
          %s179 = sadd.s32 %s177, %s178
          %s180 = smul.addr %s179, 4
          %s181 = scalar_lea.hbm %s1, %s180
          %s182 = sshll.u32 %s181, 4
          %s183 = int_to_ptr.hbm [resolvable:$true] %s182
          %s184 = sshll.u32 %s173, 4
          %s185 = int_to_ptr.vmem [resolvable:$true] %s184
          %190 = dma.hbm_to_vmem [thread:$0]  %s183, 256, %s185, %s170, 64, 64, 4
        $region24: #{tpu_custom_call.1} parent=19 // pred_fallthru
          _
      $region20: #{tpu_custom_call.1} parent=5 // pred_fallthru
        _
      %p191 = scmp.le.s32.totalorder 1, %s15
      %p192 = scmp.lt.s32.totalorder %s15, 4
      %p193 = pnand %p191, %p192
      %p194 = pneg %p193
      // Predicated region
      $region25: #{tpu_custom_call.1} parent=5 // pred_check
        _
      $region26: #{tpu_custom_call.1} parent=5 // pred_check_branch
        %196 = sbr.rel (%p193) target = $region28
      $region27: #{tpu_custom_call.1} parent=5 // pred_region
        %s197 = ssub.s32 %s15, 1
        // Predicated region
        $region29: #{tpu_custom_call.1} parent=27 // pred_check
          %p198 = pneg %p69
        $region30: #{tpu_custom_call.1} parent=27 // pred_check_branch
          %200 = sbr.rel (%p198) target = $region32
        $region31: #{tpu_custom_call.1} parent=27 // pred_region
          %202 = dma.done [#allocation4], 128
        $region32: #{tpu_custom_call.1} parent=27 // pred_fallthru
          _
        %s203 = sand.u32 %s86, 1
        %s204 = scalar_lea.sflag [#allocation7], %s203
        %s205 = sand.u32 %s86, 1
        %s206 = smul.addr %s205, 16
        %s207 = scalar_lea.vmem [#allocation6], %s206
        // Predicated region
        $region33: #{tpu_custom_call.1} parent=27 // pred_check
          %p208 = pneg %p99
        $region34: #{tpu_custom_call.1} parent=27 // pred_check_branch
          %210 = sbr.rel (%p208) target = $region36
        $region35: #{tpu_custom_call.1} parent=27 // pred_region
          %212 = dma.done %s204, 256
        $region36: #{tpu_custom_call.1} parent=27 // pred_fallthru
          _
        %p213 = pneg %p69
        %p214 = pneg %p66
        %s215 = sand.u32 %s86, 1
        %s216 = scalar_lea.sflag [#allocation7], %s215
        %s217 = sand.u32 %s86, 1
        %s218 = smul.addr %s217, 16
        %s219 = scalar_lea.vmem [#allocation6], %s218
        %p220 = pneg %p99
        %p221 = pneg %p96
        %p222 = pneg %p129
        %p223 = pneg %p126
        %s224 = sand.u32 %s116, 1
        %s225 = scalar_lea.sflag [#allocation5], %s224
        %s226 = sand.u32 %s116, 1
        %s227 = smul.addr %s226, 8
        %s228 = scalar_lea.vmem [#allocation8], %s227
        %s229 = smul.u32 2, %s26
        %s230 = smul.u32 4, %s29
        %s231 = smul.u32 2, %s26
        %p233 = scmp.eq.s32.totalorder %s29, 0
        // Predicated region
        $region37: #{tpu_custom_call.1} parent=27 // pred_check
          %p234 = pneg %p233
        $region38: #{tpu_custom_call.1} parent=27 // pred_check_branch
          %236 = sbr.rel (%p234) target = $region40
        $region39: #{tpu_custom_call.1} parent=27 // pred_region
          %vm237 = vcmask 261120
          %238 = vst.msk [vmem:[#allocation2] sm:$0xff] %vm237, 0.0
          %239 = vst.msk [vmem:[#allocation2 + $0x8] sm:$0xff] %vm237, 0.0
        $region40: #{tpu_custom_call.1} parent=27 // pred_fallthru
          _
        %v240 = vld [vmem:[#allocation2] sm:$0xff]
        %v241 = vld [vmem:[#allocation2 + $0x8] sm:$0xff]
        %v242 = vld [vmem:[#allocation3] sm:$0xf]
        %v243 = vld [vmem:[#allocation3 + $0x4] sm:$0xf]
        %v244 = vld [vmem:[%s207] sm:$0xf]
        %v245 = vld [vmem:[%s207 + $0x4] sm:$0xf]
        %v246 = vld [vmem:[%s207 + $0x8] sm:$0xf]
        %v247 = vld [vmem:[%s207 + $0xc] sm:$0xf]
        %v250 = vunpack.c.l.b16 %v242
        %v251 = vunpack.c.l.b16 %v243
        %v252 = vpack.c.b16 %v251, %v250
        %v257 = vunpack.c.l.b16 %v244
        %v258 = vunpack.c.l.b16 %v245
        %v259 = vunpack.c.l.b16 %v246
        %v260 = vunpack.c.l.b16 %v247
        %v261 = vpack.c.b16 %v258, %v257
        %v262 = vpack.c.b16 %v260, %v259
        %vm265 = vcmask 261120
        %v267 = vsel %vm265, %v252, 0
        %269 = vmatpush.bf16.msra.mxu0 0
        %270 = vmatpush.bf16.msra.mxu0 0
        %271 = vmatpush.bf16.msra.mxu0 0
        %272 = vmatpush.bf16.msra.mxu0 0
        %273 = vmatpush.bf16.msra.mxu0 0
        %274 = vmatpush.bf16.msra.mxu0 0
        %275 = vmatpush.bf16.msra.mxu0 %v262
        %276 = vmatpush.bf16.msra.mxu0 %v261
        %277 = vmatmul.bf16.gmra.mxu0 %v267
        %v278 = vpop.f32.mrf.mxu0
        %v279 = vadd.f32 0.0, %v278
        %v280 = vpop.f32.mrf.mxu0
        %v281 = vadd.f32 0.0, %v280
        %282 = vdwg.mxu0
        %v283 = vadd.f32 %v240, %v279
        %v284 = vadd.f32 %v241, %v281
        %285 = vst.msk [vmem:[#allocation2] sm:$0xff] %vm265, %v283
        %286 = vst.msk [vmem:[#allocation2 + $0x8] sm:$0xff] %vm265, %v284
        // Predicated region
        $region41: #{tpu_custom_call.1} parent=27 // pred_check
          %p287 = pneg %p233
        $region42: #{tpu_custom_call.1} parent=27 // pred_check_branch
          %289 = sbr.rel (%p287) target = $region44
        $region43: #{tpu_custom_call.1} parent=27 // pred_region
          %v290 = vld [vmem:[#allocation2] sm:$0xff]
          %v291 = vld [vmem:[#allocation2 + $0x8] sm:$0xff]
          %v292 = vpack.c.bf16 %v290, %v290
          %v293 = vpack.c.bf16 %v291, %v291
          %vm294 = vcmask 257024
          %295 = vst.msk [vmem:[%s228] sm:$0xf] %vm294, %v292
          %296 = vst.msk [vmem:[%s228 + $0x4] sm:$0xf] %vm294, %v293
        $region44: #{tpu_custom_call.1} parent=27 // pred_fallthru
          _
        %s297 = sand.u32 %s116, 1
        %s298 = scalar_lea.sflag [#allocation5], %s297
        %s299 = sand.u32 %s116, 1
        %s300 = smul.addr %s299, 8
        %s301 = scalar_lea.vmem [#allocation8], %s300
        // Predicated region
        $region45: #{tpu_custom_call.1} parent=27 // pred_check
          %p302 = pneg %p126
        $region46: #{tpu_custom_call.1} parent=27 // pred_check_branch
          %304 = sbr.rel (%p302) target = $region48
        $region47: #{tpu_custom_call.1} parent=27 // pred_region
          %s305 = smul.u32 2, %s26
          %307 = vsyncadd %s298, 0
          %s308 = sadd.s32 %s28, %s305
          %s309 = smul.addr %s27, 2
          %s310 = sadd.s32 %s308, %s309
          %s311 = smul.addr %s310, 4
          %s312 = scalar_lea.hbm %s2, %s311
          %s313 = sshll.u32 %s301, 4
          %s314 = int_to_ptr.vmem [resolvable:$true] %s313
          %s315 = sshll.u32 %s312, 4
          %s316 = int_to_ptr.hbm [resolvable:$true] %s315
          %321 = dma.vmem_to_hbm [thread:$0]  %s314, 128, %s316, %s298, 64, 64, 4
        $region48: #{tpu_custom_call.1} parent=27 // pred_fallthru
          _
      $region28: #{tpu_custom_call.1} parent=5 // pred_fallthru
        _
      %p322 = scmp.le.s32.totalorder 2, %s15
      // Predicated region
      $region49: #{tpu_custom_call.1} parent=5 // pred_check
        %p323 = pneg %p322
      $region50: #{tpu_custom_call.1} parent=5 // pred_check_branch
        %325 = sbr.rel (%p323) target = $region52
      $region51: #{tpu_custom_call.1} parent=5 // pred_region
        %s326 = ssub.s32 %s15, 2
        // Predicated region
        $region53: #{tpu_custom_call.1} parent=51 // pred_check
          %p327 = pneg %p132
        $region54: #{tpu_custom_call.1} parent=51 // pred_check_branch
          %329 = sbr.rel (%p327) target = $region56
        $region55: #{tpu_custom_call.1} parent=51 // pred_region
          %s330 = sand.u32 %s117, 1
          %s331 = scalar_lea.sflag [#allocation5], %s330
          %s332 = sand.u32 %s117, 1
          %s333 = smul.addr %s332, 8
          %s334 = scalar_lea.vmem [#allocation8], %s333
          %336 = dma.done %s331, 128
        $region56: #{tpu_custom_call.1} parent=51 // pred_fallthru
          _
      $region52: #{tpu_custom_call.1} parent=5 // pred_fallthru
        _
    $region6: #{tpu_custom_call.1} parent=1 // loop_footer
      %s19 = sadd.s32 1, %s15
    $region7: #{tpu_custom_call.1} parent=1 // loop_footer_branch
      %14 = sbr.rel target = $region3
    $region8: #{tpu_custom_call.1} parent=1 // loop_exit
      _
    %337 = vsyncpa [#allocation4], 1
    %s338 = scalar_lea.sflag [#allocation4], 1
    %339 = vsyncpa %s338, 1
    %340 = vsyncpa [#allocation7], 1
    %s341 = scalar_lea.sflag [#allocation7], 1
    %342 = vsyncpa %s341, 1
    %343 = vsyncpa [#allocation5], 1
    %s344 = scalar_lea.sflag [#allocation5], 1
    %345 = vsyncpa %s344, 1

</llo_original>
